<compile_context>
chip_gen: v7x
topology: tpu7x:2x2x1
jax: 0.10.0
libtpu: 0.0.40
codegen_flags: <defaults>
</compile_context>

<pallas_src>
import functools

import numpy as np
import jax
import jax.numpy as jnp
from jax.experimental import pallas as pl
from jax.experimental.pallas import tpu as pltpu


def _fused_weight(w):
    """OIHW (Cout, Cin, 3, 3) -> fused conv+unshuffle matmul weights (36*Cin, 4*Cout).

    K order:  ((ta*3 + tb) * 4 + qr*2 + qc) * Cin + ci
    N order:  co*4 + i*2 + j   (== PixelUnshuffle(2) channel order)
    (ta, tb): 3x3 taps in H/2 x W/2 block space; (qr, qc): sub-position of the
    input pixel in its 2x2 block; (i, j): sub-position of the output pixel.
    Original tap: dy = 2*ta + qr - 1 - i, dx = 2*tb + qc - 1 - j (0 if outside).
    """
    c_out, c_in = w.shape[0], w.shape[1]
    wt = jnp.transpose(w, (1, 0, 2, 3))                  # (Cin, Cout, ky, kx)
    wp = jnp.pad(wt, ((0, 0), (0, 0), (2, 2), (2, 2)))   # (Cin, Cout, 7, 7)
    ta = np.arange(3)[:, None, None]
    q = np.arange(2)[None, :, None]
    ij = np.arange(2)[None, None, :]
    idx = 2 * ta + q + 1 - ij                            # (3, 2, 2), values in [0, 6]
    iy = idx.reshape(3, 2, 2, 1, 1, 1)
    ix = idx.reshape(1, 1, 1, 3, 2, 2)
    g = wp[:, :, iy, ix]                                 # (Cin, Cout, 3,2,2, 3,2,2)
    # dims (ci, co, ta, qr, i, tb, qc, j) -> (ta, tb, qr, qc, ci, co, i, j)
    g = jnp.transpose(g, (2, 5, 3, 6, 0, 1, 4, 7))
    return g.reshape(36 * c_in, 4 * c_out)


def _emit_w_im2col(p_ref, row0, src, c4in, w2):
    """Write the W-direction im2col expansion of `src` into p_ref rows [row0, row0+r).

    p[row, c, tb*c4in + ch] = src_padded[row, c + tb, ch]   (SAME zero pad in W).
    """
    r = src.shape[0]
    z = jnp.zeros((r, 1, c4in), src.dtype)
    # tb = 1 (center): no W shift.
    p_ref[row0:row0 + r, :, c4in:2 * c4in] = src
    # tb = 0: p[., c] = src[., c-1]; zero at c == 0.
    p_ref[row0:row0 + r, 0:1, 0:c4in] = z
    p_ref[row0:row0 + r, 1:w2, 0:c4in] = src[:, 0:w2 - 1, :]
    # tb = 2: p[., c] = src[., c+1]; zero at c == w2-1.
    p_ref[row0:row0 + r, 0:w2 - 1, 2 * c4in:3 * c4in] = src[:, 1:w2, :]
    p_ref[row0:row0 + r, w2 - 1:w2, 2 * c4in:3 * c4in] = z


def _downsample_kernel(wf_ref, xm_ref, xt_ref, xb_ref, o_ref, p_ref):
    t = pl.program_id(1)
    nt = pl.num_programs(1)

    th2 = o_ref.shape[1]
    w2 = o_ref.shape[2]
    c4out = o_ref.shape[3]
    c4in = xm_ref.shape[3]

    # ---- W-direction im2col for the tile body (p rows [1, th2+1)) ----
    _emit_w_im2col(p_ref, 1, xm_ref[0], c4in, w2)

    # ---- H halo rows (p rows 0 and th2+1): zero at image borders ----
    @pl.when(t == 0)
    def _():
        p_ref[0:1, :, :] = jnp.zeros((1, w2, 3 * c4in), p_ref.dtype)

    @pl.when(t > 0)
    def _():
        _emit_w_im2col(p_ref, 0, xt_ref[0], c4in, w2)

    @pl.when(t == nt - 1)
    def _():
        p_ref[th2 + 1:th2 + 2, :, :] = jnp.zeros((1, w2, 3 * c4in), p_ref.dtype)

    @pl.when(t < nt - 1)
    def _():
        _emit_w_im2col(p_ref, th2 + 1, xb_ref[0], c4in, w2)

    # ---- three MXU matmuls (one per H tap), f32 accumulation ----
    acc = jnp.dot(p_ref[0:th2].reshape(th2 * w2, 3 * c4in), wf_ref[0],
                  preferred_element_type=jnp.float32)
    acc = acc + jnp.dot(p_ref[1:th2 + 1].reshape(th2 * w2, 3 * c4in), wf_ref[1],
                        preferred_element_type=jnp.float32)
    acc = acc + jnp.dot(p_ref[2:th2 + 2].reshape(th2 * w2, 3 * c4in), wf_ref[2],
                        preferred_element_type=jnp.float32)
    o_ref[0] = acc.reshape(th2, w2, c4out).astype(o_ref.dtype)


@functools.partial(jax.jit, static_argnames=("row_tile",))
def downsample(x, weight, *, row_tile=None):
    """TPMNet Downsample forward.  x: (B, C, H, W), weight: (C//2, C, 3, 3)."""
    B, C, H, W = x.shape
    c_out = weight.shape[0]
    assert H % 2 == 0 and W % 2 == 0, "PixelUnshuffle(2) needs even H and W"
    H2, W2 = H // 2, W // 2
    assert W2 >= 2
    c4in, c4out = 4 * C, 4 * c_out

    if row_tile is None:
        row_tile = next(r for r in range(min(H2, 16), 0, -1) if H2 % r == 0)
    assert H2 % row_tile == 0
    nt = H2 // row_tile

    # Space-to-depth(2) + NCHW->NHWC in one fused XLA layout pass (replaces the
    # original transpose + pad passes).  Channel order: (qr*2 + qc)*C + ci.
    x4 = x.reshape(B, C, H2, 2, W2, 2)
    x4 = jnp.transpose(x4, (0, 2, 4, 3, 5, 1)).reshape(B, H2, W2, c4in)

    # Fused weights, split by H tap: (3, 12*Cin, 4*Cout).
    wf = _fused_weight(weight).astype(x.dtype).reshape(3, 12 * C, c4out)

    y = pl.pallas_call(
        _downsample_kernel,
        out_shape=jax.ShapeDtypeStruct((B, H2, W2, c4out), x.dtype),
        grid=(B, nt),
        in_specs=[
            pl.BlockSpec((3, 12 * C, c4out), lambda b, t: (0, 0, 0)),
            pl.BlockSpec((1, row_tile, W2, c4in), lambda b, t: (b, t, 0, 0)),
            # 1-row halo blocks (block height 1 => block index == row index).
            pl.BlockSpec((1, 1, W2, c4in),
                         lambda b, t: (b, jnp.maximum(t * row_tile - 1, 0), 0, 0)),
            pl.BlockSpec((1, 1, W2, c4in),
                         lambda b, t: (b, jnp.minimum((t + 1) * row_tile, H2 - 1), 0, 0)),
        ],
        out_specs=pl.BlockSpec((1, row_tile, W2, c4out), lambda b, t: (b, t, 0, 0)),
        scratch_shapes=[
            pltpu.VMEM((row_tile + 2, W2, 3 * c4in), x.dtype),  # W-im2col buffer
        ],
        compiler_params=pltpu.CompilerParams(
            dimension_semantics=("parallel", "parallel")),
    )(wf, x4, x4, x4)

    # TODO(synk): a fully NCHW-native kernel could remove these remaining layout
    # passes; they are pure layout glue imposed by the module's NCHW contract.
    return jnp.transpose(y, (0, 3, 1, 2))                 # (B, 2*C, H//2, W//2)


def _reference(x, weight):
    """Pure-JAX reference (lax conv + PixelUnshuffle) for correctness checking."""
    y = jax.lax.conv_general_dilated(
        x, weight, window_strides=(1, 1), padding="SAME",
        dimension_numbers=("NCHW", "OIHW", "NCHW"))
    B, c_out, H, W = y.shape
    y = y.reshape(B, c_out, H // 2, 2, W // 2, 2)
    y = jnp.transpose(y, (0, 1, 3, 5, 2, 4))
    return y.reshape(B, c_out * 4, H // 2, W // 2)


if __name__ == "__main__":
    key = jax.random.PRNGKey(0)
    k_x, k_w = jax.random.split(key)

    B, n_feat, H, W = 2, 4, 16, 16
    x = jax.random.normal(k_x, (B, n_feat, H, W), dtype=jnp.float32)
    weight = 0.1 * jax.random.normal(k_w, (n_feat // 2, n_feat, 3, 3),
                                     dtype=jnp.float32)

    ref = _reference(x, weight)

    # nt=2: exercises top / bottom halo branches.
    out = jax.block_until_ready(downsample(x, weight, row_tile=4))
    assert out.shape == (B, 2 * n_feat, H // 2, W // 2), out.shape
    assert jnp.allclose(out, ref, atol=1e-4, rtol=1e-4)

    # nt=4: exercises interior tiles (both halos real data).
    out2 = jax.block_until_ready(downsample(x, weight, row_tile=2))
    assert jnp.allclose(out2, ref, atol=1e-4, rtol=1e-4)

    # nt=1: single tile, both halos zero (default tiling).
    out1 = jax.block_until_ready(downsample(x, weight))
    assert jnp.allclose(out1, ref, atol=1e-4, rtol=1e-4)

    print("KERNEL_OK")
</pallas_src>

<mosaic_0001>
module attributes {stable_mosaic.version = 11 : i64} {
  func.func @_downsample_kernel(%arg0: i32, %arg1: i32, %arg2: memref<3x48x8xf32, #tpu.memory_space<vmem>>, %arg3: memref<1x4x8x16xf32, #tpu.memory_space<vmem>>, %arg4: memref<1x1x8x16xf32, #tpu.memory_space<vmem>>, %arg5: memref<1x1x8x16xf32, #tpu.memory_space<vmem>>, %arg6: memref<1x4x8x8xf32, #tpu.memory_space<vmem>>, %arg7: memref<6x8x48xf32, #tpu.memory_space<vmem>>) attributes {dimension_semantics = [#tpu.dimension_semantics<parallel>, #tpu.dimension_semantics<parallel>], iteration_bounds = array<i64: 2, 2>, scalar_prefetch = 0 : i64, scratch_operands = 1 : i64, tpu.core_type = #tpu.core_type<tc>, window_params = [{pipeline_mode = #tpu.pipeline_mode<synchronous>, transform_indices = @transform_0, window_bounds = array<i64: 3, 48, 8>}, {transform_indices = @transform_1, window_bounds = array<i64: 1, 4, 8, 16>}, {transform_indices = @transform_2, window_bounds = array<i64: 1, 1, 8, 16>}, {transform_indices = @transform_3, window_bounds = array<i64: 1, 1, 8, 16>}, {transform_indices = @transform_4, window_bounds = array<i64: 1, 4, 8, 8>}]} {
    %c0 = arith.constant 0 : index
    %c0_0 = arith.constant 0 : index
    %c0_1 = arith.constant 0 : index
    %c0_2 = arith.constant 0 : index
    %0 = vector.load %arg3[%c0, %c0_0, %c0_1, %c0_2] : memref<1x4x8x16xf32, #tpu.memory_space<vmem>>, vector<1x4x8x16xf32>
    %1 = vector.shape_cast %0 : vector<1x4x8x16xf32> to vector<4x8x16xf32>
    %cst = arith.constant 0.000000e+00 : f32
    %2 = vector.broadcast %cst : f32 to vector<4x1x16xf32>
    %c1 = arith.constant 1 : index
    %c0_3 = arith.constant 0 : index
    %c16 = arith.constant 16 : index
    %3 = vector.load %arg7[%c1, %c0_3, %c16] : memref<6x8x48xf32, #tpu.memory_space<vmem>>, vector<4x8x16xf32>
    tpu.vector_store %arg7[%c1, %c0_3, %c16], %1 {strides = array<i32>} : memref<6x8x48xf32, #tpu.memory_space<vmem>>, vector<4x8x16xf32>,
    %c1_4 = arith.constant 1 : index
    %c0_5 = arith.constant 0 : index
    %c0_6 = arith.constant 0 : index
    %4 = vector.load %arg7[%c1_4, %c0_5, %c0_6] : memref<6x8x48xf32, #tpu.memory_space<vmem>>, vector<4x1x16xf32>
    tpu.vector_store %arg7[%c1_4, %c0_5, %c0_6], %2 {strides = array<i32>} : memref<6x8x48xf32, #tpu.memory_space<vmem>>, vector<4x1x16xf32>,
    %5 = vector.extract_strided_slice %1 {offsets = [0, 0, 0], sizes = [4, 7, 16], strides = [1, 1, 1]} : vector<4x8x16xf32> to vector<4x7x16xf32>
    %c1_7 = arith.constant 1 : index
    %c1_8 = arith.constant 1 : index
    %c0_9 = arith.constant 0 : index
    %6 = vector.load %arg7[%c1_7, %c1_8, %c0_9] : memref<6x8x48xf32, #tpu.memory_space<vmem>>, vector<4x7x16xf32>
    tpu.vector_store %arg7[%c1_7, %c1_8, %c0_9], %5 {strides = array<i32>} : memref<6x8x48xf32, #tpu.memory_space<vmem>>, vector<4x7x16xf32>,
    %7 = vector.extract_strided_slice %1 {offsets = [0, 1, 0], sizes = [4, 7, 16], strides = [1, 1, 1]} : vector<4x8x16xf32> to vector<4x7x16xf32>
    %c1_10 = arith.constant 1 : index
    %c0_11 = arith.constant 0 : index
    %c32 = arith.constant 32 : index
    %8 = vector.load %arg7[%c1_10, %c0_11, %c32] : memref<6x8x48xf32, #tpu.memory_space<vmem>>, vector<4x7x16xf32>
    tpu.vector_store %arg7[%c1_10, %c0_11, %c32], %7 {strides = array<i32>} : memref<6x8x48xf32, #tpu.memory_space<vmem>>, vector<4x7x16xf32>,
    %c1_12 = arith.constant 1 : index
    %c7 = arith.constant 7 : index
    %c32_13 = arith.constant 32 : index
    %9 = vector.load %arg7[%c1_12, %c7, %c32_13] : memref<6x8x48xf32, #tpu.memory_space<vmem>>, vector<4x1x16xf32>
    tpu.vector_store %arg7[%c1_12, %c7, %c32_13], %2 {strides = array<i32>} : memref<6x8x48xf32, #tpu.memory_space<vmem>>, vector<4x1x16xf32>,
    %c0_i32 = arith.constant 0 : i32
    %10 = arith.cmpi eq, %arg1, %c0_i32 : i32
    %11 = arith.extui %10 : i1 to i32
    %c0_i32_14 = arith.constant 0 : i32
    %12 = arith.cmpi ne, %11, %c0_i32_14 : i32
    scf.if %12 {
      %cst_44 = arith.constant 0.000000e+00 : f32
      %43 = vector.broadcast %cst_44 : f32 to vector<1x8x48xf32>
      %c0_45 = arith.constant 0 : index
      %c0_46 = arith.constant 0 : index
      %c0_47 = arith.constant 0 : index
      %44 = vector.load %arg7[%c0_45, %c0_46, %c0_47] : memref<6x8x48xf32, #tpu.memory_space<vmem>>, vector<1x8x48xf32>
      tpu.vector_store %arg7[%c0_45, %c0_46, %c0_47], %43 {strides = array<i32>} : memref<6x8x48xf32, #tpu.memory_space<vmem>>, vector<1x8x48xf32>,
    } else {
    }
    %c0_i32_15 = arith.constant 0 : i32
    %13 = arith.cmpi sgt, %arg1, %c0_i32_15 : i32
    %14 = arith.extui %13 : i1 to i32
    %c0_i32_16 = arith.constant 0 : i32
    %15 = arith.cmpi ne, %14, %c0_i32_16 : i32
    scf.if %15 {
      %c0_44 = arith.constant 0 : index
      %c0_45 = arith.constant 0 : index
      %c0_46 = arith.constant 0 : index
      %c0_47 = arith.constant 0 : index
      %43 = vector.load %arg4[%c0_44, %c0_45, %c0_46, %c0_47] : memref<1x1x8x16xf32, #tpu.memory_space<vmem>>, vector<1x1x8x16xf32>
      %44 = vector.shape_cast %43 : vector<1x1x8x16xf32> to vector<1x8x16xf32>
      %cst_48 = arith.constant 0.000000e+00 : f32
      %45 = vector.broadcast %cst_48 : f32 to vector<1x1x16xf32>
      %c0_49 = arith.constant 0 : index
      %c0_50 = arith.constant 0 : index
      %c16_51 = arith.constant 16 : index
      %46 = vector.load %arg7[%c0_49, %c0_50, %c16_51] : memref<6x8x48xf32, #tpu.memory_space<vmem>>, vector<1x8x16xf32>
      tpu.vector_store %arg7[%c0_49, %c0_50, %c16_51], %44 {strides = array<i32>} : memref<6x8x48xf32, #tpu.memory_space<vmem>>, vector<1x8x16xf32>,
      %c0_52 = arith.constant 0 : index
      %c0_53 = arith.constant 0 : index
      %c0_54 = arith.constant 0 : index
      %47 = vector.load %arg7[%c0_52, %c0_53, %c0_54] : memref<6x8x48xf32, #tpu.memory_space<vmem>>, vector<1x1x16xf32>
      tpu.vector_store %arg7[%c0_52, %c0_53, %c0_54], %45 {strides = array<i32>} : memref<6x8x48xf32, #tpu.memory_space<vmem>>, vector<1x1x16xf32>,
      %48 = vector.extract_strided_slice %44 {offsets = [0, 0, 0], sizes = [1, 7, 16], strides = [1, 1, 1]} : vector<1x8x16xf32> to vector<1x7x16xf32>
      %c0_55 = arith.constant 0 : index
      %c1_56 = arith.constant 1 : index
      %c0_57 = arith.constant 0 : index
      %49 = vector.load %arg7[%c0_55, %c1_56, %c0_57] : memref<6x8x48xf32, #tpu.memory_space<vmem>>, vector<1x7x16xf32>
      tpu.vector_store %arg7[%c0_55, %c1_56, %c0_57], %48 {strides = array<i32>} : memref<6x8x48xf32, #tpu.memory_space<vmem>>, vector<1x7x16xf32>,
      %50 = vector.extract_strided_slice %44 {offsets = [0, 1, 0], sizes = [1, 7, 16], strides = [1, 1, 1]} : vector<1x8x16xf32> to vector<1x7x16xf32>
      %c0_58 = arith.constant 0 : index
      %c0_59 = arith.constant 0 : index
      %c32_60 = arith.constant 32 : index
      %51 = vector.load %arg7[%c0_58, %c0_59, %c32_60] : memref<6x8x48xf32, #tpu.memory_space<vmem>>, vector<1x7x16xf32>
      tpu.vector_store %arg7[%c0_58, %c0_59, %c32_60], %50 {strides = array<i32>} : memref<6x8x48xf32, #tpu.memory_space<vmem>>, vector<1x7x16xf32>,
      %c0_61 = arith.constant 0 : index
      %c7_62 = arith.constant 7 : index
      %c32_63 = arith.constant 32 : index
      %52 = vector.load %arg7[%c0_61, %c7_62, %c32_63] : memref<6x8x48xf32, #tpu.memory_space<vmem>>, vector<1x1x16xf32>
      tpu.vector_store %arg7[%c0_61, %c7_62, %c32_63], %45 {strides = array<i32>} : memref<6x8x48xf32, #tpu.memory_space<vmem>>, vector<1x1x16xf32>,
    } else {
    }
    %c1_i32 = arith.constant 1 : i32
    %16 = arith.cmpi eq, %arg1, %c1_i32 : i32
    %17 = arith.extui %16 : i1 to i32
    %c0_i32_17 = arith.constant 0 : i32
    %18 = arith.cmpi ne, %17, %c0_i32_17 : i32
    scf.if %18 {
      %cst_44 = arith.constant 0.000000e+00 : f32
      %43 = vector.broadcast %cst_44 : f32 to vector<1x8x48xf32>
      %c5 = arith.constant 5 : index
      %c0_45 = arith.constant 0 : index
      %c0_46 = arith.constant 0 : index
      %44 = vector.load %arg7[%c5, %c0_45, %c0_46] : memref<6x8x48xf32, #tpu.memory_space<vmem>>, vector<1x8x48xf32>
      tpu.vector_store %arg7[%c5, %c0_45, %c0_46], %43 {strides = array<i32>} : memref<6x8x48xf32, #tpu.memory_space<vmem>>, vector<1x8x48xf32>,
    } else {
    }
    %c1_i32_18 = arith.constant 1 : i32
    %19 = arith.cmpi slt, %arg1, %c1_i32_18 : i32
    %20 = arith.extui %19 : i1 to i32
    %c0_i32_19 = arith.constant 0 : i32
    %21 = arith.cmpi ne, %20, %c0_i32_19 : i32
    scf.if %21 {
      %c0_44 = arith.constant 0 : index
      %c0_45 = arith.constant 0 : index
      %c0_46 = arith.constant 0 : index
      %c0_47 = arith.constant 0 : index
      %43 = vector.load %arg5[%c0_44, %c0_45, %c0_46, %c0_47] : memref<1x1x8x16xf32, #tpu.memory_space<vmem>>, vector<1x1x8x16xf32>
      %44 = vector.shape_cast %43 : vector<1x1x8x16xf32> to vector<1x8x16xf32>
      %cst_48 = arith.constant 0.000000e+00 : f32
      %45 = vector.broadcast %cst_48 : f32 to vector<1x1x16xf32>
      %c5 = arith.constant 5 : index
      %c0_49 = arith.constant 0 : index
      %c16_50 = arith.constant 16 : index
      %46 = vector.load %arg7[%c5, %c0_49, %c16_50] : memref<6x8x48xf32, #tpu.memory_space<vmem>>, vector<1x8x16xf32>
      tpu.vector_store %arg7[%c5, %c0_49, %c16_50], %44 {strides = array<i32>} : memref<6x8x48xf32, #tpu.memory_space<vmem>>, vector<1x8x16xf32>,
      %c5_51 = arith.constant 5 : index
      %c0_52 = arith.constant 0 : index
      %c0_53 = arith.constant 0 : index
      %47 = vector.load %arg7[%c5_51, %c0_52, %c0_53] : memref<6x8x48xf32, #tpu.memory_space<vmem>>, vector<1x1x16xf32>
      tpu.vector_store %arg7[%c5_51, %c0_52, %c0_53], %45 {strides = array<i32>} : memref<6x8x48xf32, #tpu.memory_space<vmem>>, vector<1x1x16xf32>,
      %48 = vector.extract_strided_slice %44 {offsets = [0, 0, 0], sizes = [1, 7, 16], strides = [1, 1, 1]} : vector<1x8x16xf32> to vector<1x7x16xf32>
      %c5_54 = arith.constant 5 : index
      %c1_55 = arith.constant 1 : index
      %c0_56 = arith.constant 0 : index
      %49 = vector.load %arg7[%c5_54, %c1_55, %c0_56] : memref<6x8x48xf32, #tpu.memory_space<vmem>>, vector<1x7x16xf32>
      tpu.vector_store %arg7[%c5_54, %c1_55, %c0_56], %48 {strides = array<i32>} : memref<6x8x48xf32, #tpu.memory_space<vmem>>, vector<1x7x16xf32>,
      %50 = vector.extract_strided_slice %44 {offsets = [0, 1, 0], sizes = [1, 7, 16], strides = [1, 1, 1]} : vector<1x8x16xf32> to vector<1x7x16xf32>
      %c5_57 = arith.constant 5 : index
      %c0_58 = arith.constant 0 : index
      %c32_59 = arith.constant 32 : index
      %51 = vector.load %arg7[%c5_57, %c0_58, %c32_59] : memref<6x8x48xf32, #tpu.memory_space<vmem>>, vector<1x7x16xf32>
      tpu.vector_store %arg7[%c5_57, %c0_58, %c32_59], %50 {strides = array<i32>} : memref<6x8x48xf32, #tpu.memory_space<vmem>>, vector<1x7x16xf32>,
      %c5_60 = arith.constant 5 : index
      %c7_61 = arith.constant 7 : index
      %c32_62 = arith.constant 32 : index
      %52 = vector.load %arg7[%c5_60, %c7_61, %c32_62] : memref<6x8x48xf32, #tpu.memory_space<vmem>>, vector<1x1x16xf32>
      tpu.vector_store %arg7[%c5_60, %c7_61, %c32_62], %45 {strides = array<i32>} : memref<6x8x48xf32, #tpu.memory_space<vmem>>, vector<1x1x16xf32>,
    } else {
    }
    %c0_20 = arith.constant 0 : index
    %c0_21 = arith.constant 0 : index
    %c0_22 = arith.constant 0 : index
    %22 = vector.load %arg7[%c0_20, %c0_21, %c0_22] : memref<6x8x48xf32, #tpu.memory_space<vmem>>, vector<4x8x48xf32>
    %23 = vector.shape_cast %22 : vector<4x8x48xf32> to vector<32x48xf32>
    %c0_23 = arith.constant 0 : index
    %c0_24 = arith.constant 0 : index
    %c0_25 = arith.constant 0 : index
    %24 = vector.load %arg2[%c0_23, %c0_24, %c0_25] : memref<3x48x8xf32, #tpu.memory_space<vmem>>, vector<1x48x8xf32>
    %25 = vector.shape_cast %24 : vector<1x48x8xf32> to vector<48x8xf32>
    %cst_26 = arith.constant dense<0.000000e+00> : vector<32x8xf32>
    %26 = tpu.matmul %23, %25, %cst_26 {dimension_numbers = #tpu.dot_dimension_numbers<[1], [0], [0], [1], [0, 0, 1, 1], [], []>} : vector<32x48xf32>, vector<48x8xf32>, vector<32x8xf32> -> vector<32x8xf32>
    %c1_27 = arith.constant 1 : index
    %c0_28 = arith.constant 0 : index
    %c0_29 = arith.constant 0 : index
    %27 = vector.load %arg7[%c1_27, %c0_28, %c0_29] : memref<6x8x48xf32, #tpu.memory_space<vmem>>, vector<4x8x48xf32>
    %28 = vector.shape_cast %27 : vector<4x8x48xf32> to vector<32x48xf32>
    %c1_30 = arith.constant 1 : index
    %c0_31 = arith.constant 0 : index
    %c0_32 = arith.constant 0 : index
    %29 = vector.load %arg2[%c1_30, %c0_31, %c0_32] : memref<3x48x8xf32, #tpu.memory_space<vmem>>, vector<1x48x8xf32>
    %30 = vector.shape_cast %29 : vector<1x48x8xf32> to vector<48x8xf32>
    %cst_33 = arith.constant dense<0.000000e+00> : vector<32x8xf32>
    %31 = tpu.matmul %28, %30, %cst_33 {dimension_numbers = #tpu.dot_dimension_numbers<[1], [0], [0], [1], [0, 0, 1, 1], [], []>} : vector<32x48xf32>, vector<48x8xf32>, vector<32x8xf32> -> vector<32x8xf32>
    %32 = arith.addf %26, %31 : vector<32x8xf32>
    %c2 = arith.constant 2 : index
    %c0_34 = arith.constant 0 : index
    %c0_35 = arith.constant 0 : index
    %33 = vector.load %arg7[%c2, %c0_34, %c0_35] : memref<6x8x48xf32, #tpu.memory_space<vmem>>, vector<4x8x48xf32>
    %34 = vector.shape_cast %33 : vector<4x8x48xf32> to vector<32x48xf32>
    %c2_36 = arith.constant 2 : index
    %c0_37 = arith.constant 0 : index
    %c0_38 = arith.constant 0 : index
    %35 = vector.load %arg2[%c2_36, %c0_37, %c0_38] : memref<3x48x8xf32, #tpu.memory_space<vmem>>, vector<1x48x8xf32>
    %36 = vector.shape_cast %35 : vector<1x48x8xf32> to vector<48x8xf32>
    %cst_39 = arith.constant dense<0.000000e+00> : vector<32x8xf32>
    %37 = tpu.matmul %34, %36, %cst_39 {dimension_numbers = #tpu.dot_dimension_numbers<[1], [0], [0], [1], [0, 0, 1, 1], [], []>} : vector<32x48xf32>, vector<48x8xf32>, vector<32x8xf32> -> vector<32x8xf32>
    %38 = arith.addf %32, %37 : vector<32x8xf32>
    %39 = vector.shape_cast %38 : vector<32x8xf32> to vector<4x8x8xf32>
    %c0_40 = arith.constant 0 : index
    %c0_41 = arith.constant 0 : index
    %c0_42 = arith.constant 0 : index
    %c0_43 = arith.constant 0 : index
    %40 = vector.load %arg6[%c0_40, %c0_41, %c0_42, %c0_43] : memref<1x4x8x8xf32, #tpu.memory_space<vmem>>, vector<1x4x8x8xf32>
    %41 = vector.shape_cast %40 : vector<1x4x8x8xf32> to vector<4x8x8xf32>
    %42 = vector.shape_cast %39 : vector<4x8x8xf32> to vector<1x4x8x8xf32>
    tpu.vector_store %arg6[%c0_40, %c0_41, %c0_42, %c0_43], %42 {strides = array<i32>} : memref<1x4x8x8xf32, #tpu.memory_space<vmem>>, vector<1x4x8x8xf32>,
    return
  }
  func.func @transform_0(%arg0: i32, %arg1: i32) -> (i32, i32, i32) {
    %c0_i32 = arith.constant 0 : i32
    %c0_i32_0 = arith.constant 0 : i32
    %c0_i32_1 = arith.constant 0 : i32
    %c0_i32_2 = arith.constant 0 : i32
    return %c0_i32, %c0_i32_0, %c0_i32_1 : i32, i32, i32
  }
  func.func @transform_1(%arg0: i32, %arg1: i32) -> (i32, i32, i32, i32) {
    %c0_i32 = arith.constant 0 : i32
    %c0_i32_0 = arith.constant 0 : i32
    %c0_i32_1 = arith.constant 0 : i32
    return %arg0, %arg1, %c0_i32, %c0_i32_0 : i32, i32, i32, i32
  }
  func.func @transform_2(%arg0: i32, %arg1: i32) -> (i32, i32, i32, i32) {
    %c4_i32 = arith.constant 4 : i32
    %0 = arith.muli %arg1, %c4_i32 : i32
    %c1_i32 = arith.constant 1 : i32
    %1 = arith.subi %0, %c1_i32 : i32
    %c0_i32 = arith.constant 0 : i32
    %2 = arith.maxsi %1, %c0_i32 : i32
    %c0_i32_0 = arith.constant 0 : i32
    %c0_i32_1 = arith.constant 0 : i32
    %c0_i32_2 = arith.constant 0 : i32
    return %arg0, %2, %c0_i32_0, %c0_i32_1 : i32, i32, i32, i32
  }
  func.func @transform_3(%arg0: i32, %arg1: i32) -> (i32, i32, i32, i32) {
    %c1_i32 = arith.constant 1 : i32
    %0 = arith.addi %arg1, %c1_i32 : i32
    %c4_i32 = arith.constant 4 : i32
    %1 = arith.muli %0, %c4_i32 : i32
    %c7_i32 = arith.constant 7 : i32
    %2 = arith.minsi %1, %c7_i32 : i32
    %c0_i32 = arith.constant 0 : i32
    %c0_i32_0 = arith.constant 0 : i32
    %c0_i32_1 = arith.constant 0 : i32
    return %arg0, %2, %c0_i32, %c0_i32_0 : i32, i32, i32, i32
  }
  func.func @transform_4(%arg0: i32, %arg1: i32) -> (i32, i32, i32, i32) {
    %c0_i32 = arith.constant 0 : i32
    %c0_i32_0 = arith.constant 0 : i32
    %c0_i32_1 = arith.constant 0 : i32
    return %arg0, %arg1, %c0_i32, %c0_i32_0 : i32, i32, i32, i32
  }
}

</mosaic_0001>

<llo_original>
// kernel: downsample.1
$region0: #{downsample.1}
  #allocation0 [shape = 'u32[]', space=smem, size = 0x4, offset = 0x4, fixed_abs, tag = 'smem constant byte address 0x4 - core index']
  #allocation1 [shape = 'u32[144,128]{1,0:T(1,128)}', space=vmem, size = 0x12000, scoped, tag = 'internal scratch']
  #allocation2 [shape = 'f32[6,8,48]{2,1,0:T(8,128)}', space=vmem, size = 0x6000, scoped, tag = 'scratch operand']
  %s0 = inlined_call_operand.vmem [shape: f32[3,48,8], index: 0, kind: input, shape index: {}]
  %s1 = inlined_call_operand.vmem [shape: f32[2,8,8,16], index: 1, kind: input, shape index: {}, may-alias: {1,2,3}]
  %s2 = inlined_call_operand.vmem [shape: f32[2,8,8,16], index: 2, kind: input, shape index: {}, may-alias: {1,2,3}]
  %s3 = inlined_call_operand.vmem [shape: f32[2,8,8,16], index: 3, kind: input, shape index: {}, may-alias: {1,2,3}]
  %s4 = inlined_call_operand.vmem [shape: f32[2,8,8,8], index: 4, kind: output, shape index: {}]
  %s5 = sld [smem:[#allocation0]]
  $region65: #{downsample.1} parent=0
    _
  %s7 = ssub.s32 1, %s5
  %s8 = scalar_select 0, %s7, %s5
  loop: start=0, step=1, limit=6
  $region2: #{downsample.1} parent=0 // loop_pre_header
    _
  $region3: #{downsample.1} parent=0 // loop_header
    %s10 = sphi 0, %s14
    %p11 = scmp.ge.s32.totalorder %s10, 6
    %s17 = sphi 0, %s29
    %s18 = sphi 0, %s25
    %s19 = sphi 0, %s17
    %s20 = sphi 0, %s18
    %s21 = sphi 0, %s19
    %s22 = sphi 0, %s20
    %s30 = sphi 0, %s30
    %s32 = sphi 0, %s30
    %s33 = sphi 0, %s32
    %s47 = sphi 0, %s33
    %s55 = sphi 0, %s57
    %s58 = sphi 0, %s55
    %s59 = sphi 0, %s58
    %s75 = sphi 0, %s59
    %s91 = sphi 0, %s93
    %s94 = sphi 0, %s91
    %s95 = sphi 0, %s94
    %s111 = sphi 0, %s95
    %s127 = sphi 0, %s129
    %s130 = sphi 0, %s127
    %s131 = sphi 0, %s130
    %s147 = sphi 0, %s131
    %s155 = sphi 0, %s157
    %s158 = sphi 0, %s155
    %s159 = sphi 0, %s158
    %s175 = sphi 0, %s159
  $region4: #{downsample.1} parent=0 // loop_header_branch
    %13 = sbr.rel (%p11) target = $region8
  $region5: #{downsample.1} parent=0 // loop_body
    %s15 = ssub.s32 %s10, 1
    %s16 = ssub.s32 %s10, 2
    %s23 = sadd.s32 1, %s18
    %p24 = scmp.ge.s32.totalorder %s23, 2
    %s25 = scalar_select %p24, 0, %s23
    %s26 = sadd.s32 1, %s17
    %s27 = scalar_select %p24, %s26, %s17
    %p28 = scmp.ge.s32.totalorder %s27, 2
    %s29 = scalar_select %p28, 0, %s27
    %s31 = sadd.s32 %s30, 1
    %p34 = scmp.eq.s32.totalorder %s10, 3
    %p35 = scmp.ne.s32.totalorder %s30, %s32
    %p36 = scmp.eq.s32.totalorder %s10, 0
    %p37 = por %p35, %p36
    %p38 = scmp.ne.s32.totalorder %s30, %s32
    %p39 = scmp.eq.s32.totalorder %s15, 3
    %p40 = por %p38, %p39
    %p41 = scmp.ne.s32.totalorder %s32, %s33
    %p42 = scmp.eq.s32.totalorder %s15, 0
    %p43 = por %p41, %p42
    %p44 = scmp.ne.s32.totalorder %s32, %s33
    %p45 = scmp.eq.s32.totalorder %s16, 3
    %p46 = por %p44, %p45
    %p48 = scmp.ne.s32.totalorder %s33, %s47
    %p49 = scmp.eq.s32.totalorder %s16, 0
    %p50 = por %p48, %p49
    %s51 = ssub.s32 %s17, %s29
    %s52 = ssub.s32 %s18, %s25
    %s53 = sor.u32 %s51, %s52
    %p54 = scmp.eq.s32.totalorder %s53, 0
    %s56 = sadd.s32 %s55, 1
    %s57 = scalar_select %p54, %s55, %s56
    %p60 = pneg %p54
    %p61 = scmp.eq.s32.totalorder %s10, 3
    %p62 = por %p60, %p61
    %p63 = scmp.ne.s32.totalorder %s55, %s58
    %p64 = scmp.eq.s32.totalorder %s10, 0
    %p65 = por %p63, %p64
    %p66 = scmp.ne.s32.totalorder %s55, %s58
    %p67 = scmp.eq.s32.totalorder %s15, 3
    %p68 = por %p66, %p67
    %p69 = scmp.ne.s32.totalorder %s58, %s59
    %p70 = scmp.eq.s32.totalorder %s15, 0
    %p71 = por %p69, %p70
    %p72 = scmp.ne.s32.totalorder %s58, %s59
    %p73 = scmp.eq.s32.totalorder %s16, 3
    %p74 = por %p72, %p73
    %p76 = scmp.ne.s32.totalorder %s59, %s75
    %p77 = scmp.eq.s32.totalorder %s16, 0
    %p78 = por %p76, %p77
    %s79 = smul.u32 %s18, 4
    %s80 = ssub.s32 %s79, 1
    %p81 = scmp.gt.s32.totalorder %s80, 0
    %s82 = scalar_select %p81, %s80, 0
    %s83 = smul.u32 %s25, 4
    %s84 = ssub.s32 %s83, 1
    %p85 = scmp.gt.s32.totalorder %s84, 0
    %s86 = scalar_select %p85, %s84, 0
    %s87 = ssub.s32 %s17, %s29
    %s88 = ssub.s32 %s82, %s86
    %s89 = sor.u32 %s87, %s88
    %p90 = scmp.eq.s32.totalorder %s89, 0
    %s92 = sadd.s32 %s91, 1
    %s93 = scalar_select %p90, %s91, %s92
    %p96 = pneg %p90
    %p97 = scmp.eq.s32.totalorder %s10, 3
    %p98 = por %p96, %p97
    %p99 = scmp.ne.s32.totalorder %s91, %s94
    %p100 = scmp.eq.s32.totalorder %s10, 0
    %p101 = por %p99, %p100
    %p102 = scmp.ne.s32.totalorder %s91, %s94
    %p103 = scmp.eq.s32.totalorder %s15, 3
    %p104 = por %p102, %p103
    %p105 = scmp.ne.s32.totalorder %s94, %s95
    %p106 = scmp.eq.s32.totalorder %s15, 0
    %p107 = por %p105, %p106
    %p108 = scmp.ne.s32.totalorder %s94, %s95
    %p109 = scmp.eq.s32.totalorder %s16, 3
    %p110 = por %p108, %p109
    %p112 = scmp.ne.s32.totalorder %s95, %s111
    %p113 = scmp.eq.s32.totalorder %s16, 0
    %p114 = por %p112, %p113
    %s115 = sadd.s32 %s18, 1
    %s116 = smul.u32 %s115, 4
    %p117 = scmp.lt.s32.totalorder %s116, 7
    %s118 = scalar_select %p117, %s116, 7
    %s119 = sadd.s32 %s25, 1
    %s120 = smul.u32 %s119, 4
    %p121 = scmp.lt.s32.totalorder %s120, 7
    %s122 = scalar_select %p121, %s120, 7
    %s123 = ssub.s32 %s17, %s29
    %s124 = ssub.s32 %s118, %s122
    %s125 = sor.u32 %s123, %s124
    %p126 = scmp.eq.s32.totalorder %s125, 0
    %s128 = sadd.s32 %s127, 1
    %s129 = scalar_select %p126, %s127, %s128
    %p132 = pneg %p126
    %p133 = scmp.eq.s32.totalorder %s10, 3
    %p134 = por %p132, %p133
    %p135 = scmp.ne.s32.totalorder %s127, %s130
    %p136 = scmp.eq.s32.totalorder %s10, 0
    %p137 = por %p135, %p136
    %p138 = scmp.ne.s32.totalorder %s127, %s130
    %p139 = scmp.eq.s32.totalorder %s15, 3
    %p140 = por %p138, %p139
    %p141 = scmp.ne.s32.totalorder %s130, %s131
    %p142 = scmp.eq.s32.totalorder %s15, 0
    %p143 = por %p141, %p142
    %p144 = scmp.ne.s32.totalorder %s130, %s131
    %p145 = scmp.eq.s32.totalorder %s16, 3
    %p146 = por %p144, %p145
    %p148 = scmp.ne.s32.totalorder %s131, %s147
    %p149 = scmp.eq.s32.totalorder %s16, 0
    %p150 = por %p148, %p149
    %s151 = ssub.s32 %s17, %s29
    %s152 = ssub.s32 %s18, %s25
    %s153 = sor.u32 %s151, %s152
    %p154 = scmp.eq.s32.totalorder %s153, 0
    %s156 = sadd.s32 %s155, 1
    %s157 = scalar_select %p154, %s155, %s156
    %p160 = pneg %p154
    %p161 = scmp.eq.s32.totalorder %s10, 3
    %p162 = por %p160, %p161
    %p163 = scmp.ne.s32.totalorder %s155, %s158
    %p164 = scmp.eq.s32.totalorder %s10, 0
    %p165 = por %p163, %p164
    %p166 = scmp.ne.s32.totalorder %s155, %s158
    %p167 = scmp.eq.s32.totalorder %s15, 3
    %p168 = por %p166, %p167
    %p169 = scmp.ne.s32.totalorder %s158, %s159
    %p170 = scmp.eq.s32.totalorder %s15, 0
    %p171 = por %p169, %p170
    %p172 = scmp.ne.s32.totalorder %s158, %s159
    %p173 = scmp.eq.s32.totalorder %s16, 3
    %p174 = por %p172, %p173
    %p176 = scmp.ne.s32.totalorder %s159, %s175
    %p177 = scmp.eq.s32.totalorder %s16, 0
    %p178 = por %p176, %p177
    %p179 = scmp.le.s32.totalorder 1, %s10
    %p180 = scmp.lt.s32.totalorder %s10, 5
    %p181 = pnand %p179, %p180
    %p182 = pneg %p181
    // Predicated region
    $region9: #{downsample.1} parent=5 // pred_check
      _
    $region10: #{downsample.1} parent=5 // pred_check_branch
      %184 = sbr.rel (%p181) target = $region12
    $region11: #{downsample.1} parent=5 // pred_region
      %s185 = ssub.s32 %s10, 1
      // Predicated region
      $region13: #{downsample.1} parent=11 // pred_check
        %p186 = pneg %p43
      $region14: #{downsample.1} parent=11 // pred_check_branch
        %188 = sbr.rel (%p186) target = $region16
      $region15: #{downsample.1} parent=11 // pred_region
        _
      $region16: #{downsample.1} parent=11 // pred_fallthru
        _
    $region12: #{downsample.1} parent=5 // pred_fallthru
      _
    %p189 = scmp.lt.s32.totalorder %s10, 4
    // Predicated region
    $region17: #{downsample.1} parent=5 // pred_check
      %p190 = pneg %p189
    $region18: #{downsample.1} parent=5 // pred_check_branch
      %192 = sbr.rel (%p190) target = $region20
    $region19: #{downsample.1} parent=5 // pred_region
      // Predicated region
      $region21: #{downsample.1} parent=19 // pred_check
        %p193 = pneg %p65
      $region22: #{downsample.1} parent=19 // pred_check_branch
        %195 = sbr.rel (%p193) target = $region24
      $region23: #{downsample.1} parent=19 // pred_region
        %s196 = smul.u32 4, %s18
        %p197 = scmp.lt.s32.totalorder %s17, 1
        %s198 = scalar_select %p197, %s17, 1
        %p199 = scmp.lt.s32.totalorder %s196, 7
        %s200 = scalar_select %p199, %s196, 7
        %s201 = smul.addr %s198, 8
        %s202 = sadd.s32 %s200, %s201
        %s203 = smul.addr %s202, 8
        %s204 = scalar_lea.vmem %s1, %s203
        %s205 = smul.u32 4, %s18
      $region24: #{downsample.1} parent=19 // pred_fallthru
        _
      // Predicated region
      $region25: #{downsample.1} parent=19 // pred_check
        %p206 = pneg %p101
      $region26: #{downsample.1} parent=19 // pred_check_branch
        %208 = sbr.rel (%p206) target = $region28
      $region27: #{downsample.1} parent=19 // pred_region
        %s209 = smul.u32 %s18, 4
        %s210 = ssub.s32 %s209, 1
        %p211 = scmp.gt.s32.totalorder %s210, 0
        %s212 = scalar_select %p211, %s210, 0
        %p213 = scmp.lt.s32.totalorder %s17, 1
        %s214 = scalar_select %p213, %s17, 1
        %p215 = scmp.lt.s32.totalorder %s212, 7
        %s216 = scalar_select %p215, %s212, 7
        %s217 = smul.addr %s214, 8
        %s218 = sadd.s32 %s216, %s217
        %s219 = smul.addr %s218, 8
        %s220 = scalar_lea.vmem %s2, %s219
        %s221 = smul.u32 %s18, 4
        %s222 = ssub.s32 %s221, 1
        %p223 = scmp.gt.s32.totalorder %s222, 0
        %s224 = scalar_select %p223, %s222, 0
      $region28: #{downsample.1} parent=19 // pred_fallthru
        _
      // Predicated region
      $region29: #{downsample.1} parent=19 // pred_check
        %p225 = pneg %p137
      $region30: #{downsample.1} parent=19 // pred_check_branch
        %227 = sbr.rel (%p225) target = $region32
      $region31: #{downsample.1} parent=19 // pred_region
        %s228 = sadd.s32 %s18, 1
        %s229 = smul.u32 %s228, 4
        %p230 = scmp.lt.s32.totalorder %s229, 7
        %s231 = scalar_select %p230, %s229, 7
        %p232 = scmp.lt.s32.totalorder %s17, 1
        %s233 = scalar_select %p232, %s17, 1
        %p234 = scmp.lt.s32.totalorder %s231, 7
        %s235 = scalar_select %p234, %s231, 7
        %s236 = smul.addr %s233, 8
        %s237 = sadd.s32 %s235, %s236
        %s238 = smul.addr %s237, 8
        %s239 = scalar_lea.vmem %s3, %s238
        %s240 = sadd.s32 %s18, 1
        %s241 = smul.u32 %s240, 4
        %p242 = scmp.lt.s32.totalorder %s241, 7
        %s243 = scalar_select %p242, %s241, 7
      $region32: #{downsample.1} parent=19 // pred_fallthru
        _
    $region20: #{downsample.1} parent=5 // pred_fallthru
      _
    %p244 = scmp.le.s32.totalorder 1, %s10
    %p245 = scmp.lt.s32.totalorder %s10, 5
    %p246 = pnand %p244, %p245
    %p247 = pneg %p246
    // Predicated region
    $region33: #{downsample.1} parent=5 // pred_check
      _
    $region34: #{downsample.1} parent=5 // pred_check_branch
      %249 = sbr.rel (%p246) target = $region36
    $region35: #{downsample.1} parent=5 // pred_region
      %s250 = ssub.s32 %s10, 1
      %p251 = pneg %p43
      %p252 = pneg %p40
      %s253 = smul.u32 4, %s20
      %p254 = scmp.lt.s32.totalorder %s19, 1
      %s255 = scalar_select %p254, %s19, 1
      %p256 = scmp.lt.s32.totalorder %s253, 7
      %s257 = scalar_select %p256, %s253, 7
      %s258 = smul.addr %s255, 8
      %s259 = sadd.s32 %s257, %s258
      %s260 = smul.addr %s259, 8
      %s261 = scalar_lea.vmem %s1, %s260
      %p262 = pneg %p71
      %p263 = pneg %p68
      %s264 = smul.u32 %s20, 4
      %s265 = ssub.s32 %s264, 1
      %p266 = scmp.gt.s32.totalorder %s265, 0
      %s267 = scalar_select %p266, %s265, 0
      %p268 = scmp.lt.s32.totalorder %s19, 1
      %s269 = scalar_select %p268, %s19, 1
      %p270 = scmp.lt.s32.totalorder %s267, 7
      %s271 = scalar_select %p270, %s267, 7
      %s272 = smul.addr %s269, 8
      %s273 = sadd.s32 %s271, %s272
      %s274 = smul.addr %s273, 8
      %s275 = scalar_lea.vmem %s2, %s274
      %p276 = pneg %p107
      %p277 = pneg %p104
      %s278 = sadd.s32 %s20, 1
      %s279 = smul.u32 %s278, 4
      %p280 = scmp.lt.s32.totalorder %s279, 7
      %s281 = scalar_select %p280, %s279, 7
      %p282 = scmp.lt.s32.totalorder %s19, 1
      %s283 = scalar_select %p282, %s19, 1
      %p284 = scmp.lt.s32.totalorder %s281, 7
      %s285 = scalar_select %p284, %s281, 7
      %s286 = smul.addr %s283, 8
      %s287 = sadd.s32 %s285, %s286
      %s288 = smul.addr %s287, 8
      %s289 = scalar_lea.vmem %s3, %s288
      %p290 = pneg %p143
      %p291 = pneg %p140
      %p292 = pneg %p171
      %p293 = pneg %p168
      %s294 = smul.u32 4, %s20
      %p295 = scmp.lt.s32.totalorder %s19, 1
      %s296 = scalar_select %p295, %s19, 1
      %p297 = scmp.lt.s32.totalorder %s294, 7
      %s298 = scalar_select %p297, %s294, 7
      %s299 = smul.addr %s296, 8
      %s300 = sadd.s32 %s298, %s299
      %s301 = smul.addr %s300, 8
      %s302 = scalar_lea.vmem %s4, %s301
      %s303 = smul.u32 4, %s20
      %p304 = scmp.lt.s32.totalorder %s19, 1
      %s305 = scalar_select %p304, %s19, 1
      %p306 = scmp.lt.s32.totalorder %s303, 7
      %s307 = scalar_select %p306, %s303, 7
      %s308 = smul.addr %s305, 8
      %s309 = sadd.s32 %s307, %s308
      %s310 = smul.addr %s309, 8
      %s311 = scalar_lea.vmem %s1, %s310
      %s312 = smul.u32 4, %s20
      %s313 = smul.u32 %s20, 4
      %s314 = ssub.s32 %s313, 1
      %p315 = scmp.gt.s32.totalorder %s314, 0
      %s316 = scalar_select %p315, %s314, 0
      %p317 = scmp.lt.s32.totalorder %s19, 1
      %s318 = scalar_select %p317, %s19, 1
      %p319 = scmp.lt.s32.totalorder %s316, 7
      %s320 = scalar_select %p319, %s316, 7
      %s321 = smul.addr %s318, 8
      %s322 = sadd.s32 %s320, %s321
      %s323 = smul.addr %s322, 8
      %s324 = scalar_lea.vmem %s2, %s323
      %s325 = smul.u32 %s20, 4
      %s326 = ssub.s32 %s325, 1
      %p327 = scmp.gt.s32.totalorder %s326, 0
      %s328 = scalar_select %p327, %s326, 0
      %s329 = sadd.s32 %s20, 1
      %s330 = smul.u32 %s329, 4
      %p331 = scmp.lt.s32.totalorder %s330, 7
      %s332 = scalar_select %p331, %s330, 7
      %p333 = scmp.lt.s32.totalorder %s19, 1
      %s334 = scalar_select %p333, %s19, 1
      %p335 = scmp.lt.s32.totalorder %s332, 7
      %s336 = scalar_select %p335, %s332, 7
      %s337 = smul.addr %s334, 8
      %s338 = sadd.s32 %s336, %s337
      %s339 = smul.addr %s338, 8
      %s340 = scalar_lea.vmem %s3, %s339
      %s341 = sadd.s32 %s20, 1
      %s342 = smul.u32 %s341, 4
      %p343 = scmp.lt.s32.totalorder %s342, 7
      %s344 = scalar_select %p343, %s342, 7
      %s345 = smul.u32 4, %s20
      %p346 = scmp.lt.s32.totalorder %s19, 1
      %s347 = scalar_select %p346, %s19, 1
      %p348 = scmp.lt.s32.totalorder %s345, 7
      %s349 = scalar_select %p348, %s345, 7
      %s350 = smul.addr %s347, 8
      %s351 = sadd.s32 %s349, %s350
      %s352 = smul.addr %s351, 8
      %s353 = scalar_lea.vmem %s4, %s352
      %s354 = smul.u32 4, %s20
      %v355 = vld [vmem:[%s311] sm:$0xff]
      %v356 = vld [vmem:[%s311 + $0x8] sm:$0xff]
      %v357 = vld [vmem:[%s311 + $0x10] sm:$0xff]
      %v358 = vld [vmem:[%s311 + $0x18] sm:$0xff]
      %363 = vrot.lane.b32.xlu0 %v355, 16
      %v364 = vpop.permute.xlu0 %363
      %365 = vrot.lane.b32.xlu0 %v356, 16
      %v366 = vpop.permute.xlu0 %365
      %367 = vrot.lane.b32.xlu0 %v357, 16
      %v368 = vpop.permute.xlu0 %367
      %369 = vrot.lane.b32.xlu0 %v358, 16
      %v370 = vpop.permute.xlu0 %369
      %s375 = scalar_lea.vmem [#allocation2], 8
      %vm376 = vcmask 261248
      %377 = vst.msk [vmem:[%s375] sm:$0xff] %vm376, %v364
      %378 = vst.msk [vmem:[%s375 + $0x8] sm:$0xff] %vm376, %v366
      %379 = vst.msk [vmem:[%s375 + $0x10] sm:$0xff] %vm376, %v368
      %380 = vst.msk [vmem:[%s375 + $0x18] sm:$0xff] %vm376, %v370
      %vm381 = vcmask 122880
      %382 = vst.msk [vmem:[%s375] sm:$0x1] %vm381, 0.0
      %383 = vst.msk [vmem:[%s375 + $0x8] sm:$0x1] %vm381, 0.0
      %384 = vst.msk [vmem:[%s375 + $0x10] sm:$0x1] %vm381, 0.0
      %385 = vst.msk [vmem:[%s375 + $0x18] sm:$0x1] %vm381, 0.0
      %vm386 = vcmask 129024
      %387 = vst.msk [vmem:[%s375 + $0x1] sm:$0x7f] %vm386, %v355
      %388 = vst.msk [vmem:[%s375 + $0x9] sm:$0x7f] %vm386, %v356
      %389 = vst.msk [vmem:[%s375 + $0x11] sm:$0x7f] %vm386, %v357
      %390 = vst.msk [vmem:[%s375 + $0x19] sm:$0x7f] %vm386, %v358
      %391 = vrot.lane.b32.xlu0 %v355, 32
      %v392 = vpop.permute.xlu0 %391
      %393 = vrot.lane.b32.xlu0 %v356, 32
      %v394 = vpop.permute.xlu0 %393
      %395 = vrot.lane.b32.xlu0 %v357, 32
      %v396 = vpop.permute.xlu0 %395
      %397 = vrot.lane.b32.xlu0 %v358, 32
      %v398 = vpop.permute.xlu0 %397
      %vm403 = vcmask 392449
      %404 = vst.msk [vmem:[%s375 - $0x1] sm:$0xfe] %vm403, %v392
      %405 = vst.msk [vmem:[%s375 + $0x7] sm:$0xfe] %vm403, %v394
      %406 = vst.msk [vmem:[%s375 + $0xf] sm:$0xfe] %vm403, %v396
      %407 = vst.msk [vmem:[%s375 + $0x17] sm:$0xfe] %vm403, %v398
      %vm408 = vcmask 385280
      %409 = vst.msk [vmem:[%s375 + $0x7] sm:$0x1] %vm408, 0.0
      %410 = vst.msk [vmem:[%s375 + $0xf] sm:$0x1] %vm408, 0.0
      %411 = vst.msk [vmem:[%s375 + $0x17] sm:$0x1] %vm408, 0.0
      %412 = vst.msk [vmem:[%s375 + $0x1f] sm:$0x1] %vm408, 0.0
      %p413 = scmp.eq.s32.totalorder %s20, 0
      // Predicated region
      $region37: #{downsample.1} parent=35 // pred_check
        %p414 = pneg %p413
      $region38: #{downsample.1} parent=35 // pred_check_branch
        %416 = sbr.rel (%p414) target = $region40
      $region39: #{downsample.1} parent=35 // pred_region
        %vm417 = vcmask 392192
        %418 = vst.msk [vmem:[#allocation2] sm:$0xff] %vm417, 0.0
      $region40: #{downsample.1} parent=35 // pred_fallthru
        _
      %p419 = scmp.gt.s32.totalorder %s20, 0
      // Predicated region
      $region41: #{downsample.1} parent=35 // pred_check
        %p420 = pneg %p419
      $region42: #{downsample.1} parent=35 // pred_check_branch
        %422 = sbr.rel (%p420) target = $region44
      $region43: #{downsample.1} parent=35 // pred_region
        %v423 = vld [vmem:[%s324] sm:$0xff]
        %425 = vrot.lane.b32.xlu0 %v423, 16
        %v426 = vpop.permute.xlu0 %425
        %428 = vst.msk [vmem:[#allocation2] sm:$0xff] %vm376, %v426
        %429 = vst.msk [vmem:[#allocation2] sm:$0x1] %vm381, 0.0
        %430 = vst.msk [vmem:[#allocation2 + $0x1] sm:$0x7f] %vm386, %v423
        %431 = vrot.lane.b32.xlu0 %v423, 32
        %v432 = vpop.permute.xlu0 %431
        %434 = vst.msk [vmem:[#allocation2 - $0x1] sm:$0xfe] %vm403, %v432
        %435 = vst.msk [vmem:[#allocation2 + $0x7] sm:$0x1] %vm408, 0.0
      $region44: #{downsample.1} parent=35 // pred_fallthru
        _
      %p436 = scmp.eq.s32.totalorder %s20, 1
      // Predicated region
      $region45: #{downsample.1} parent=35 // pred_check
        %p437 = pneg %p436
      $region46: #{downsample.1} parent=35 // pred_check_branch
        %439 = sbr.rel (%p437) target = $region48
      $region47: #{downsample.1} parent=35 // pred_region
        %s440 = scalar_lea.vmem [#allocation2], 40
        %vm441 = vcmask 392192
        %442 = vst.msk [vmem:[%s440] sm:$0xff] %vm441, 0.0
      $region48: #{downsample.1} parent=35 // pred_fallthru
        _
      %p443 = scmp.lt.s32.totalorder %s20, 1
      // Predicated region
      $region49: #{downsample.1} parent=35 // pred_check
        %p444 = pneg %p443
      $region50: #{downsample.1} parent=35 // pred_check_branch
        %446 = sbr.rel (%p444) target = $region52
      $region51: #{downsample.1} parent=35 // pred_region
        %v447 = vld [vmem:[%s340] sm:$0xff]
        %449 = vrot.lane.b32.xlu0 %v447, 16
        %v450 = vpop.permute.xlu0 %449
        %s452 = scalar_lea.vmem [#allocation2], 40
        %453 = vst.msk [vmem:[%s452] sm:$0xff] %vm376, %v450
        %454 = vst.msk [vmem:[%s452] sm:$0x1] %vm381, 0.0
        %455 = vst.msk [vmem:[%s452 + $0x1] sm:$0x7f] %vm386, %v447
        %456 = vrot.lane.b32.xlu0 %v447, 32
        %v457 = vpop.permute.xlu0 %456
        %459 = vst.msk [vmem:[%s452 - $0x1] sm:$0xfe] %vm403, %v457
        %460 = vst.msk [vmem:[%s452 + $0x7] sm:$0x1] %vm408, 0.0
      $region52: #{downsample.1} parent=35 // pred_fallthru
        _
      %v461 = vld [vmem:[#allocation2] sm:$0xff]
      %v462 = vld [vmem:[#allocation2 + $0x8] sm:$0xff]
      %v463 = vld [vmem:[#allocation2 + $0x10] sm:$0xff]
      %v464 = vld [vmem:[#allocation2 + $0x18] sm:$0xff]
      %v465 = vld [vmem:[%s0] sm:$0xff]
      %v466 = vld [vmem:[%s0 + $0x8] sm:$0xff]
      %v467 = vld [vmem:[%s0 + $0x10] sm:$0xff]
      %v468 = vld [vmem:[%s0 + $0x18] sm:$0xff]
      %v469 = vld [vmem:[%s0 + $0x20] sm:$0xff]
      %v470 = vld [vmem:[%s0 + $0x28] sm:$0xff]
      %v471 = vld [vmem:[%s375] sm:$0xff]
      %v472 = vld [vmem:[%s375 + $0x8] sm:$0xff]
      %v473 = vld [vmem:[%s375 + $0x10] sm:$0xff]
      %v474 = vld [vmem:[%s375 + $0x18] sm:$0xff]
      %s475 = scalar_lea.vmem %s0, 48
      %v476 = vld [vmem:[%s475] sm:$0xff]
      %v477 = vld [vmem:[%s475 + $0x8] sm:$0xff]
      %v478 = vld [vmem:[%s475 + $0x10] sm:$0xff]
      %v479 = vld [vmem:[%s475 + $0x18] sm:$0xff]
      %v480 = vld [vmem:[%s475 + $0x20] sm:$0xff]
      %v481 = vld [vmem:[%s475 + $0x28] sm:$0xff]
      %vm482 = vcmask 392192
      %v484 = vsel %vm482, %v471, 0
      %v487 = vsel %vm482, %v472, 0
      %v490 = vsel %vm482, %v473, 0
      %v493 = vsel %vm482, %v474, 0
      %495 = vmatprep.subr.mxu0 0.0
      %496 = vmatpush1.msra.mxu0 %v476
      %497 = vmatprep.subr.mxu0 0.0
      %498 = vmatpush1.msra.mxu0 %v477
      %499 = vmatprep.subr.mxu0 0.0
      %500 = vmatpush1.msra.mxu0 %v478
      %501 = vmatprep.subr.mxu0 0.0
      %502 = vmatpush1.msra.mxu0 %v479
      %503 = vmatprep.subr.mxu0 0.0
      %504 = vmatpush1.msra.mxu0 %v480
      %505 = vmatprep.subr.mxu0 0.0
      %506 = vmatpush1.msra.mxu0 %v481
      %507 = vmatprep.subr.mxu0 0.0
      %508 = vmatpush1.msra.mxu0 0.0
      %509 = vmatprep.subr.mxu0 0.0
      %510 = vmatpush1.msra.mxu0 0.0
      %511 = vmatprep.subr.mxu0 0.0
      %512 = vmatpush1.msra.mxu0 0.0
      %513 = vmatprep.subr.mxu0 0.0
      %514 = vmatpush1.msra.mxu0 0.0
      %515 = vmatprep.subr.mxu0 0.0
      %516 = vmatpush1.msra.mxu0 0.0
      %517 = vmatprep.subr.mxu0 0.0
      %518 = vmatpush1.msra.mxu0 0.0
      %519 = vmatprep.subr.mxu0 0.0
      %520 = vmatpush1.msra.mxu0 0.0
      %521 = vmatprep.subr.mxu0 0.0
      %522 = vmatpush1.msra.mxu0 0.0
      %523 = vmatprep.subr.mxu0 0.0
      %524 = vmatpush1.msra.mxu0 0.0
      %525 = vmatprep.subr.mxu0 0.0
      %526 = vmatpush1.msra.mxu0 0.0
      %527 = vmatprep.subr.mxu0 0.0
      %528 = vmatpush1.msra.mxu0 0.0
      %529 = vmatprep.subr.mxu0 0.0
      %530 = vmatpush1.msra.mxu0 0.0
      %531 = vmatprep.subr.mxu0 0.0
      %532 = vmatpush1.msra.mxu0 0.0
      %533 = vmatprep.subr.mxu0 0.0
      %534 = vmatpush1.msra.mxu0 0.0
      %535 = vmatprep.subr.mxu0 0.0
      %536 = vmatpush1.msra.mxu0 0.0
      %537 = vmatprep.subr.mxu0 0.0
      %538 = vmatpush1.msra.mxu0 0.0
      %539 = vmatprep.subr.mxu0 0.0
      %540 = vmatpush1.msra.mxu0 0.0
      %541 = vmatprep.subr.mxu0 0.0
      %542 = vmatpush1.msra.mxu0 0.0
      %543 = vmatprep.subr.mxu0 0.0
      %544 = vmatpush1.msra.mxu0 0.0
      %545 = vmatprep.subr.mxu0 0.0
      %546 = vmatpush1.msra.mxu0 0.0
      %547 = vmatprep.subr.mxu0 0.0
      %548 = vmatpush1.msra.mxu0 0.0
      %549 = vmatprep.subr.mxu0 0.0
      %550 = vmatpush1.msra.mxu0 0.0
      %551 = vmatprep.subr.mxu0 0.0
      %552 = vmatpush1.msra.mxu0 0.0
      %553 = vmatprep.subr.mxu0 0.0
      %554 = vmatpush1.msra.mxu0 0.0
      %555 = vmatprep.subr.mxu0 0.0
      %556 = vmatpush1.msra.mxu0 0.0
      %557 = vmatprep.subr.mxu0 0.0
      %558 = vmatpush1.msra.mxu0 0.0
      %559 = vmatprep.mubr.f32.mxu0 0.0
      %560 = vmatmul.mubr.f32.gmra.mrb[0].mxu0 %v484
      %v561 = vpop.f32.mrb[0].mxu0
      %v562 = vadd.f32 0.0, %v561
      %v563 = vpop.f32.mrb[0].mxu0
      %564 = vmatprep.mubr.f32.mxu0 0.0
      %565 = vmatmul.mubr.f32.gmra.mrb[0].mxu0 %v487
      %v566 = vpop.f32.mrb[0].mxu0
      %v567 = vadd.f32 0.0, %v566
      %v568 = vpop.f32.mrb[0].mxu0
      %569 = vmatprep.mubr.f32.mxu0 0.0
      %570 = vmatmul.mubr.f32.gmra.mrb[0].mxu0 %v490
      %v571 = vpop.f32.mrb[0].mxu0
      %v572 = vadd.f32 0.0, %v571
      %v573 = vpop.f32.mrb[0].mxu0
      %574 = vmatprep.mubr.f32.mxu0 0.0
      %575 = vmatmul.mubr.f32.gmra.mrb[0].mxu0 %v493
      %v576 = vpop.f32.mrb[0].mxu0
      %v577 = vadd.f32 0.0, %v576
      %v578 = vpop.f32.mrb[0].mxu0
      %579 = vdwg.mxu0
      %v581 = vsel %vm482, %v461, 0
      %v584 = vsel %vm482, %v462, 0
      %v587 = vsel %vm482, %v463, 0
      %v590 = vsel %vm482, %v464, 0
      %592 = vmatprep.subr.mxu0 0.0
      %593 = vmatpush1.msra.mxu0 %v465
      %594 = vmatprep.subr.mxu0 0.0
      %595 = vmatpush1.msra.mxu0 %v466
      %596 = vmatprep.subr.mxu0 0.0
      %597 = vmatpush1.msra.mxu0 %v467
      %598 = vmatprep.subr.mxu0 0.0
      %599 = vmatpush1.msra.mxu0 %v468
      %600 = vmatprep.subr.mxu0 0.0
      %601 = vmatpush1.msra.mxu0 %v469
      %602 = vmatprep.subr.mxu0 0.0
      %603 = vmatpush1.msra.mxu0 %v470
      %604 = vmatprep.subr.mxu0 0.0
      %605 = vmatpush1.msra.mxu0 0.0
      %606 = vmatprep.subr.mxu0 0.0
      %607 = vmatpush1.msra.mxu0 0.0
      %608 = vmatprep.subr.mxu0 0.0
      %609 = vmatpush1.msra.mxu0 0.0
      %610 = vmatprep.subr.mxu0 0.0
      %611 = vmatpush1.msra.mxu0 0.0
      %612 = vmatprep.subr.mxu0 0.0
      %613 = vmatpush1.msra.mxu0 0.0
      %614 = vmatprep.subr.mxu0 0.0
      %615 = vmatpush1.msra.mxu0 0.0
      %616 = vmatprep.subr.mxu0 0.0
      %617 = vmatpush1.msra.mxu0 0.0
      %618 = vmatprep.subr.mxu0 0.0
      %619 = vmatpush1.msra.mxu0 0.0
      %620 = vmatprep.subr.mxu0 0.0
      %621 = vmatpush1.msra.mxu0 0.0
      %622 = vmatprep.subr.mxu0 0.0
      %623 = vmatpush1.msra.mxu0 0.0
      %624 = vmatprep.subr.mxu0 0.0
      %625 = vmatpush1.msra.mxu0 0.0
      %626 = vmatprep.subr.mxu0 0.0
      %627 = vmatpush1.msra.mxu0 0.0
      %628 = vmatprep.subr.mxu0 0.0
      %629 = vmatpush1.msra.mxu0 0.0
      %630 = vmatprep.subr.mxu0 0.0
      %631 = vmatpush1.msra.mxu0 0.0
      %632 = vmatprep.subr.mxu0 0.0
      %633 = vmatpush1.msra.mxu0 0.0
      %634 = vmatprep.subr.mxu0 0.0
      %635 = vmatpush1.msra.mxu0 0.0
      %636 = vmatprep.subr.mxu0 0.0
      %637 = vmatpush1.msra.mxu0 0.0
      %638 = vmatprep.subr.mxu0 0.0
      %639 = vmatpush1.msra.mxu0 0.0
      %640 = vmatprep.subr.mxu0 0.0
      %641 = vmatpush1.msra.mxu0 0.0
      %642 = vmatprep.subr.mxu0 0.0
      %643 = vmatpush1.msra.mxu0 0.0
      %644 = vmatprep.subr.mxu0 0.0
      %645 = vmatpush1.msra.mxu0 0.0
      %646 = vmatprep.subr.mxu0 0.0
      %647 = vmatpush1.msra.mxu0 0.0
      %648 = vmatprep.subr.mxu0 0.0
      %649 = vmatpush1.msra.mxu0 0.0
      %650 = vmatprep.subr.mxu0 0.0
      %651 = vmatpush1.msra.mxu0 0.0
      %652 = vmatprep.subr.mxu0 0.0
      %653 = vmatpush1.msra.mxu0 0.0
      %654 = vmatprep.subr.mxu0 0.0
      %655 = vmatpush1.msra.mxu0 0.0
      %656 = vmatprep.mubr.f32.mxu0 0.0
      %657 = vmatmul.mubr.f32.gmra.mrb[0].mxu0 %v581
      %v658 = vpop.f32.mrb[0].mxu0
      %v659 = vadd.f32 %v562, %v658
      %v660 = vpop.f32.mrb[0].mxu0
      %661 = vmatprep.mubr.f32.mxu0 0.0
      %662 = vmatmul.mubr.f32.gmra.mrb[0].mxu0 %v584
      %v663 = vpop.f32.mrb[0].mxu0
      %v664 = vadd.f32 %v567, %v663
      %v665 = vpop.f32.mrb[0].mxu0
      %666 = vmatprep.mubr.f32.mxu0 0.0
      %667 = vmatmul.mubr.f32.gmra.mrb[0].mxu0 %v587
      %v668 = vpop.f32.mrb[0].mxu0
      %v669 = vadd.f32 %v572, %v668
      %v670 = vpop.f32.mrb[0].mxu0
      %671 = vmatprep.mubr.f32.mxu0 0.0
      %672 = vmatmul.mubr.f32.gmra.mrb[0].mxu0 %v590
      %v673 = vpop.f32.mrb[0].mxu0
      %v674 = vadd.f32 %v577, %v673
      %v675 = vpop.f32.mrb[0].mxu0
      %676 = vdwg.mxu0
      %s677 = scalar_lea.vmem [#allocation2], 16
      %v678 = vld [vmem:[%s677] sm:$0xff]
      %v679 = vld [vmem:[%s677 + $0x8] sm:$0xff]
      %v680 = vld [vmem:[%s677 + $0x10] sm:$0xff]
      %v681 = vld [vmem:[%s677 + $0x18] sm:$0xff]
      %s682 = scalar_lea.vmem %s0, 96
      %v683 = vld [vmem:[%s682] sm:$0xff]
      %v684 = vld [vmem:[%s682 + $0x8] sm:$0xff]
      %v685 = vld [vmem:[%s682 + $0x10] sm:$0xff]
      %v686 = vld [vmem:[%s682 + $0x18] sm:$0xff]
      %v687 = vld [vmem:[%s682 + $0x20] sm:$0xff]
      %v688 = vld [vmem:[%s682 + $0x28] sm:$0xff]
      %v690 = vsel %vm482, %v678, 0
      %v693 = vsel %vm482, %v679, 0
      %v696 = vsel %vm482, %v680, 0
      %v699 = vsel %vm482, %v681, 0
      %701 = vmatprep.subr.mxu0 0.0
      %702 = vmatpush1.msra.mxu0 %v683
      %703 = vmatprep.subr.mxu0 0.0
      %704 = vmatpush1.msra.mxu0 %v684
      %705 = vmatprep.subr.mxu0 0.0
      %706 = vmatpush1.msra.mxu0 %v685
      %707 = vmatprep.subr.mxu0 0.0
      %708 = vmatpush1.msra.mxu0 %v686
      %709 = vmatprep.subr.mxu0 0.0
      %710 = vmatpush1.msra.mxu0 %v687
      %711 = vmatprep.subr.mxu0 0.0
      %712 = vmatpush1.msra.mxu0 %v688
      %713 = vmatprep.subr.mxu0 0.0
      %714 = vmatpush1.msra.mxu0 0.0
      %715 = vmatprep.subr.mxu0 0.0
      %716 = vmatpush1.msra.mxu0 0.0
      %717 = vmatprep.subr.mxu0 0.0
      %718 = vmatpush1.msra.mxu0 0.0
      %719 = vmatprep.subr.mxu0 0.0
      %720 = vmatpush1.msra.mxu0 0.0
      %721 = vmatprep.subr.mxu0 0.0
      %722 = vmatpush1.msra.mxu0 0.0
      %723 = vmatprep.subr.mxu0 0.0
      %724 = vmatpush1.msra.mxu0 0.0
      %725 = vmatprep.subr.mxu0 0.0
      %726 = vmatpush1.msra.mxu0 0.0
      %727 = vmatprep.subr.mxu0 0.0
      %728 = vmatpush1.msra.mxu0 0.0
      %729 = vmatprep.subr.mxu0 0.0
      %730 = vmatpush1.msra.mxu0 0.0
      %731 = vmatprep.subr.mxu0 0.0
      %732 = vmatpush1.msra.mxu0 0.0
      %733 = vmatprep.subr.mxu0 0.0
      %734 = vmatpush1.msra.mxu0 0.0
      %735 = vmatprep.subr.mxu0 0.0
      %736 = vmatpush1.msra.mxu0 0.0
      %737 = vmatprep.subr.mxu0 0.0
      %738 = vmatpush1.msra.mxu0 0.0
      %739 = vmatprep.subr.mxu0 0.0
      %740 = vmatpush1.msra.mxu0 0.0
      %741 = vmatprep.subr.mxu0 0.0
      %742 = vmatpush1.msra.mxu0 0.0
      %743 = vmatprep.subr.mxu0 0.0
      %744 = vmatpush1.msra.mxu0 0.0
      %745 = vmatprep.subr.mxu0 0.0
      %746 = vmatpush1.msra.mxu0 0.0
      %747 = vmatprep.subr.mxu0 0.0
      %748 = vmatpush1.msra.mxu0 0.0
      %749 = vmatprep.subr.mxu0 0.0
      %750 = vmatpush1.msra.mxu0 0.0
      %751 = vmatprep.subr.mxu0 0.0
      %752 = vmatpush1.msra.mxu0 0.0
      %753 = vmatprep.subr.mxu0 0.0
      %754 = vmatpush1.msra.mxu0 0.0
      %755 = vmatprep.subr.mxu0 0.0
      %756 = vmatpush1.msra.mxu0 0.0
      %757 = vmatprep.subr.mxu0 0.0
      %758 = vmatpush1.msra.mxu0 0.0
      %759 = vmatprep.subr.mxu0 0.0
      %760 = vmatpush1.msra.mxu0 0.0
      %761 = vmatprep.subr.mxu0 0.0
      %762 = vmatpush1.msra.mxu0 0.0
      %763 = vmatprep.subr.mxu0 0.0
      %764 = vmatpush1.msra.mxu0 0.0
      %765 = vmatprep.mubr.f32.mxu0 0.0
      %766 = vmatmul.mubr.f32.gmra.mrb[0].mxu0 %v690
      %v767 = vpop.f32.mrb[0].mxu0
      %v768 = vadd.f32 0.0, %v767
      %v769 = vpop.f32.mrb[0].mxu0
      %770 = vmatprep.mubr.f32.mxu0 0.0
      %771 = vmatmul.mubr.f32.gmra.mrb[0].mxu0 %v693
      %v772 = vpop.f32.mrb[0].mxu0
      %v773 = vadd.f32 0.0, %v772
      %v774 = vpop.f32.mrb[0].mxu0
      %775 = vmatprep.mubr.f32.mxu0 0.0
      %776 = vmatmul.mubr.f32.gmra.mrb[0].mxu0 %v696
      %v777 = vpop.f32.mrb[0].mxu0
      %v778 = vadd.f32 0.0, %v777
      %v779 = vpop.f32.mrb[0].mxu0
      %780 = vmatprep.mubr.f32.mxu0 0.0
      %781 = vmatmul.mubr.f32.gmra.mrb[0].mxu0 %v699
      %v782 = vpop.f32.mrb[0].mxu0
      %v783 = vadd.f32 0.0, %v782
      %v784 = vpop.f32.mrb[0].mxu0
      %785 = vdwg.mxu0
      %v786 = vadd.f32 %v659, %v768
      %v787 = vadd.f32 %v664, %v773
      %v788 = vadd.f32 %v669, %v778
      %v789 = vadd.f32 %v674, %v783
      %vm790 = vcmask 64512
      %791 = vst.msk [vmem:[%s353] sm:$0xff] %vm790, %v786
      %792 = vst.msk [vmem:[%s353 + $0x8] sm:$0xff] %vm790, %v787
      %793 = vst.msk [vmem:[%s353 + $0x10] sm:$0xff] %vm790, %v788
      %794 = vst.msk [vmem:[%s353 + $0x18] sm:$0xff] %vm790, %v789
      %s795 = smul.u32 4, %s20
      %p796 = scmp.lt.s32.totalorder %s19, 1
      %s797 = scalar_select %p796, %s19, 1
      %p798 = scmp.lt.s32.totalorder %s795, 7
      %s799 = scalar_select %p798, %s795, 7
      %s800 = smul.addr %s797, 8
      %s801 = sadd.s32 %s799, %s800
      %s802 = smul.addr %s801, 8
      %s803 = scalar_lea.vmem %s4, %s802
      // Predicated region
      $region53: #{downsample.1} parent=35 // pred_check
        %p804 = pneg %p168
      $region54: #{downsample.1} parent=35 // pred_check_branch
        %806 = sbr.rel (%p804) target = $region56
      $region55: #{downsample.1} parent=35 // pred_region
        %s807 = smul.u32 4, %s20
      $region56: #{downsample.1} parent=35 // pred_fallthru
        _
    $region36: #{downsample.1} parent=5 // pred_fallthru
      _
    %p808 = scmp.le.s32.totalorder 2, %s10
    // Predicated region
    $region57: #{downsample.1} parent=5 // pred_check
      %p809 = pneg %p808
    $region58: #{downsample.1} parent=5 // pred_check_branch
      %811 = sbr.rel (%p809) target = $region60
    $region59: #{downsample.1} parent=5 // pred_region
      %s812 = ssub.s32 %s10, 2
      // Predicated region
      $region61: #{downsample.1} parent=59 // pred_check
        %p813 = pneg %p174
      $region62: #{downsample.1} parent=59 // pred_check_branch
        %815 = sbr.rel (%p813) target = $region64
      $region63: #{downsample.1} parent=59 // pred_region
        %s816 = smul.u32 4, %s22
        %p817 = scmp.lt.s32.totalorder %s21, 1
        %s818 = scalar_select %p817, %s21, 1
        %p819 = scmp.lt.s32.totalorder %s816, 7
        %s820 = scalar_select %p819, %s816, 7
        %s821 = smul.addr %s818, 8
        %s822 = sadd.s32 %s820, %s821
        %s823 = smul.addr %s822, 8
        %s824 = scalar_lea.vmem %s4, %s823
      $region64: #{downsample.1} parent=59 // pred_fallthru
        _
    $region60: #{downsample.1} parent=5 // pred_fallthru
      _
  $region6: #{downsample.1} parent=0 // loop_footer
    %s14 = sadd.s32 1, %s10
  $region7: #{downsample.1} parent=0 // loop_footer_branch
    %9 = sbr.rel target = $region3
  $region8: #{downsample.1} parent=0 // loop_exit
    _

</llo_original>
